<compile_context>
chip_gen: v5e
topology: v5e:2x2
jax: 0.10.0
libtpu: 0.0.40
codegen_flags: <defaults>
</compile_context>

<pallas_src>
import math

import jax
import jax.numpy as jnp
from jax import lax
from jax.experimental import pallas as pl
from jax.experimental.pallas import tpu as pltpu


def _round_up(a: int, b: int) -> int:
    return (a + b - 1) // b * b


def _gelu_f32(h):
    # Exact erf-based gelu, matching the PyTorch module, kept in f32.
    return h * 0.5 * (1.0 + lax.erf(h * (1.0 / math.sqrt(2.0))))


# ----------------------------- kernels --------------------------------------

def _ffn_resident_kernel(x_ref, w1t_ref, w2t_ref, o_ref):
    # x_ref: (tm, dim) in x.dtype; w1t_ref: (dim, inter) bf16 (resident);
    # w2t_ref: (inter, dim) bf16 (resident); o_ref: (tm, dim).
    xb = x_ref[...].astype(jnp.bfloat16)
    h = jnp.dot(xb, w1t_ref[...], preferred_element_type=jnp.float32)
    h = _gelu_f32(h)
    o_ref[...] = jnp.dot(h.astype(jnp.bfloat16), w2t_ref[...],
                         preferred_element_type=jnp.float32).astype(o_ref.dtype)


def _ffn_tiled_kernel(x_ref, w1t_ref, w2t_ref, o_ref, acc_ref):
    # x_ref: (tm, dim) (resident across k); w1t_ref: (dim, tk) bf16;
    # w2t_ref: (tk, dim) bf16; o_ref: (tm, dim); acc_ref: (tm, dim) f32.
    k = pl.program_id(1)
    xb = x_ref[...].astype(jnp.bfloat16)
    h = jnp.dot(xb, w1t_ref[...], preferred_element_type=jnp.float32)
    h = _gelu_f32(h)
    part = jnp.dot(h.astype(jnp.bfloat16), w2t_ref[...],
                   preferred_element_type=jnp.float32)

    @pl.when(k == 0)
    def _():
        acc_ref[...] = part          # write first partial directly

    @pl.when(k > 0)
    def _():
        acc_ref[...] += part

    @pl.when(k == pl.num_programs(1) - 1)
    def _():
        o_ref[...] = acc_ref[...].astype(o_ref.dtype)


# --------------------------- sizing helpers ----------------------------------

def _vmem_capacity_bytes() -> int:
    try:
        cap = getattr(pltpu.get_tpu_info(), "vmem_capacity_bytes", None)
        if cap:
            return int(cap)
    except Exception:
        pass
    return 64 * 1024 * 1024   # conservative fallback (v7x per-TensorCore VMEM)


def _resident_bytes(tm, dim, inter, xbytes, obytes):
    return (2 * tm * dim * xbytes + 2 * tm * dim * obytes   # x / out (dbl-buf)
            + 2 * 2 * dim * inter * 2                       # both weights
            + tm * inter * 12)                              # h f32 + temps


def _tiled_bytes(tm, tk, dim, xbytes, obytes):
    return (2 * tm * dim * xbytes + 2 * tm * dim * obytes   # x / out (dbl-buf)
            + 2 * dim * tk * 2 + 2 * tk * dim * 2           # weight tiles
            + tm * dim * 4                                  # f32 accumulator
            + tm * tk * 12)                                 # h f32 + temps


# ------------------------------ wrappers -------------------------------------

def prepare_ffn_weights(w1: jax.Array, w2: jax.Array):
    """Once-per-parameter-load weight prep (hoisted out of the forward):
    transpose to matmul layout and cast to bf16.
    w1: (inter, dim), w2: (dim, inter)  ->  w1t: (dim, inter), w2t: (inter, dim).
    """
    inter, dim = w1.shape
    assert w2.shape == (dim, inter)
    return (jnp.asarray(w1).T.astype(jnp.bfloat16),
            jnp.asarray(w2).T.astype(jnp.bfloat16))


def feed_forward_prepared(x: jax.Array, w1t: jax.Array, w2t: jax.Array,
                          *, tm_target: int = 512, tk_target: int = 1024,
                          force_tiled: bool = False) -> jax.Array:
    """out = gelu(x @ w1.T) @ w2.T with pre-prepared (transposed bf16) weights."""
    orig_shape = x.shape
    dim, inter = w1t.shape
    assert w2t.shape == (inter, dim)
    assert orig_shape[-1] == dim

    x2d = x.reshape(-1, dim)
    m = x2d.shape[0]
    xbytes = x2d.dtype.itemsize
    obytes = x2d.dtype.itemsize          # output kept in x.dtype

    cap = _vmem_capacity_bytes()
    vmem_limit = int(min(cap * 3 // 4, 110 * 1024 * 1024))
    budget = int(vmem_limit * 0.9)
    small_vmem_chip = cap <= 64 * 1024 * 1024   # v7x-like (2 TensorCores)

    # Row tile: multiple of 16 (native bf16 sublane packing).
    tm = min(_round_up(tm_target, 16), _round_up(m, 16))
    # On v7x-like parts, prefer >= 2 M tiles so both TensorCores get work.
    if small_vmem_chip and m > 256 and _round_up(m, tm) // tm < 2:
        tm = max(128, _round_up(-(-m // 2), 16))

    # --- Path 1: weights fully resident in VMEM (read from HBM exactly once).
    tm_res = tm
    while tm_res > 128 and _resident_bytes(tm_res, dim, inter, xbytes, obytes) > budget:
        tm_res = max(128, _round_up(tm_res // 2, 16))
    use_resident = (not force_tiled) and (
        _resident_bytes(tm_res, dim, inter, xbytes, obytes) <= budget)

    if use_resident:
        tm = tm_res
        m_pad = _round_up(m, tm)
        xp = x2d if m_pad == m else jnp.pad(x2d, ((0, m_pad - m), (0, 0)))
        out2d = pl.pallas_call(
            _ffn_resident_kernel,
            out_shape=jax.ShapeDtypeStruct((m_pad, dim), x.dtype),
            grid=(m_pad // tm,),
            in_specs=[
                pl.BlockSpec((tm, dim), lambda i: (i, 0)),
                pl.BlockSpec((dim, inter), lambda i: (0, 0)),   # resident
                pl.BlockSpec((inter, dim), lambda i: (0, 0)),   # resident
            ],
            out_specs=pl.BlockSpec((tm, dim), lambda i: (i, 0)),
            compiler_params=pltpu.CompilerParams(
                dimension_semantics=("parallel",),
                vmem_limit_bytes=vmem_limit,
            ),
        )(xp, w1t, w2t)
    else:
        # --- Path 2: tile the intermediate dim, accumulate in f32 VMEM scratch.
        tk = min(_round_up(tk_target, 128), _round_up(inter, 128))
        while tk > 256 and _tiled_bytes(tm, tk, dim, xbytes, obytes) > budget:
            tk = max(256, tk // 2)
        while tm > 128 and _tiled_bytes(tm, tk, dim, xbytes, obytes) > budget:
            tm = max(128, _round_up(tm // 2, 16))
        # TODO(synk): for dim >= 4096 on 64 MiB parts, also tile the output dim
        # (third grid axis) instead of only shrinking tm.

        m_pad = _round_up(m, tm)
        k_pad = _round_up(inter, tk)
        xp = x2d if m_pad == m else jnp.pad(x2d, ((0, m_pad - m), (0, 0)))
        w1p, w2p = w1t, w2t
        if k_pad != inter:
            # Exact: gelu(0) == 0 and the padded w2 rows are zero.
            w1p = jnp.pad(w1t, ((0, 0), (0, k_pad - inter)))
            w2p = jnp.pad(w2t, ((0, k_pad - inter), (0, 0)))

        out2d = pl.pallas_call(
            _ffn_tiled_kernel,
            out_shape=jax.ShapeDtypeStruct((m_pad, dim), x.dtype),
            grid=(m_pad // tm, k_pad // tk),
            in_specs=[
                pl.BlockSpec((tm, dim), lambda i, k: (i, 0)),   # resident over k
                pl.BlockSpec((dim, tk), lambda i, k: (0, k)),
                pl.BlockSpec((tk, dim), lambda i, k: (k, 0)),
            ],
            out_specs=pl.BlockSpec((tm, dim), lambda i, k: (i, 0)),
            scratch_shapes=[pltpu.VMEM((tm, dim), jnp.float32)],
            compiler_params=pltpu.CompilerParams(
                dimension_semantics=("parallel", "arbitrary"),
                vmem_limit_bytes=vmem_limit,
            ),
        )(xp, w1p, w2p)

    if m_pad != m:
        out2d = out2d[:m]
    return out2d.reshape(orig_shape)


def feed_forward(x: jax.Array, w1: jax.Array, w2: jax.Array, **kw) -> jax.Array:
    """Convenience wrapper taking nn.Linear-layout weights (w1: (inter, dim),
    w2: (dim, inter)).  Prefer prepare_ffn_weights() once + feed_forward_prepared()
    per call so the transpose/bf16 cast is not paid every forward."""
    w1t, w2t = prepare_ffn_weights(w1, w2)
    return feed_forward_prepared(x, w1t, w2t, **kw)


def _reference(x, w1, w2):
    # f32 reference matching the PyTorch module exactly.
    h = x @ w1.T
    h = h * 0.5 * (1.0 + lax.erf(h / math.sqrt(2.0)))
    return h @ w2.T


if __name__ == "__main__":
    batch, seq, dim, intermediate_dim = 2, 8, 128, 512

    key = jax.random.PRNGKey(0)
    kx, k1, k2 = jax.random.split(key, 3)

    x = jax.random.normal(kx, (batch, seq, dim), dtype=jnp.float32)
    # Deterministic synthetic weights (nn.Linear weight shapes, bias=False).
    w1 = jax.random.normal(k1, (intermediate_dim, dim), dtype=jnp.float32) * 0.05
    w2 = jax.random.normal(k2, (dim, intermediate_dim), dtype=jnp.float32) * 0.05

    ref = _reference(x, w1, w2)

    # Weight prep hoisted out of the forward (done once).
    w1t, w2t = prepare_ffn_weights(w1, w2)

    # Auto-selected path (weights-resident at these shapes).
    out = jax.block_until_ready(feed_forward_prepared(x, w1t, w2t))
    assert out.shape == (batch, seq, dim)
    # bf16 MXU operands -> relaxed tolerance vs the f32 reference.
    assert jnp.allclose(out, ref, atol=5e-2, rtol=5e-2), "resident path mismatch"

    # Tiled-reduction path (forced, small tk so multiple k steps are exercised).
    out_t = jax.block_until_ready(
        feed_forward_prepared(x, w1t, w2t, force_tiled=True, tk_target=128))
    assert out_t.shape == (batch, seq, dim)
    assert jnp.allclose(out_t, ref, atol=5e-2, rtol=5e-2), "tiled path mismatch"

    print("KERNEL_OK")
</pallas_src>

<mosaic_0001>
module attributes {stable_mosaic.version = 11 : i64} {
  func.func @_ffn_resident_kernel(%arg0: i32, %arg1: memref<16x128xf32, #tpu.memory_space<vmem>>, %arg2: memref<128x512xbf16, #tpu.memory_space<vmem>>, %arg3: memref<512x128xbf16, #tpu.memory_space<vmem>>, %arg4: memref<16x128xf32, #tpu.memory_space<vmem>>) attributes {dimension_semantics = [#tpu.dimension_semantics<parallel>], iteration_bounds = array<i64: 1>, scalar_prefetch = 0 : i64, scratch_operands = 0 : i64, tpu.core_type = #tpu.core_type<tc>, window_params = [{transform_indices = @transform_0, window_bounds = array<i64: 16, 128>}, {pipeline_mode = #tpu.pipeline_mode<synchronous>, transform_indices = @transform_1, window_bounds = array<i64: 128, 512>}, {pipeline_mode = #tpu.pipeline_mode<synchronous>, transform_indices = @transform_2, window_bounds = array<i64: 512, 128>}, {transform_indices = @transform_3, window_bounds = array<i64: 16, 128>}]} {
    %c0 = arith.constant 0 : index
    %c0_0 = arith.constant 0 : index
    %0 = vector.load %arg1[%c0, %c0_0] : memref<16x128xf32, #tpu.memory_space<vmem>>, vector<16x128xf32>
    %1 = arith.truncf %0 : vector<16x128xf32> to vector<16x128xbf16>
    %c0_1 = arith.constant 0 : index
    %c0_2 = arith.constant 0 : index
    %2 = vector.load %arg2[%c0_1, %c0_2] : memref<128x512xbf16, #tpu.memory_space<vmem>>, vector<128x512xbf16>
    %cst = arith.constant dense<0.000000e+00> : vector<16x512xf32>
    %3 = tpu.matmul %1, %2, %cst {dimension_numbers = #tpu.dot_dimension_numbers<[1], [0], [0], [1], [0, 0, 1, 1], [], []>} : vector<16x128xbf16>, vector<128x512xbf16>, vector<16x512xf32> -> vector<16x512xf32>
    %cst_3 = arith.constant 5.000000e-01 : f32
    %4 = vector.broadcast %cst_3 : f32 to vector<16x512xf32>
    %5 = arith.mulf %3, %4 : vector<16x512xf32>
    %cst_4 = arith.constant 0.707106769 : f32
    %6 = vector.broadcast %cst_4 : f32 to vector<16x512xf32>
    %7 = arith.mulf %3, %6 : vector<16x512xf32>
    %8 = math.erf %7 : vector<16x512xf32>
    %cst_5 = arith.constant 1.000000e+00 : f32
    %9 = vector.broadcast %cst_5 : f32 to vector<16x512xf32>
    %10 = arith.addf %9, %8 : vector<16x512xf32>
    %11 = arith.mulf %5, %10 : vector<16x512xf32>
    %12 = arith.truncf %11 : vector<16x512xf32> to vector<16x512xbf16>
    %c0_6 = arith.constant 0 : index
    %c0_7 = arith.constant 0 : index
    %13 = vector.load %arg3[%c0_6, %c0_7] : memref<512x128xbf16, #tpu.memory_space<vmem>>, vector<512x128xbf16>
    %cst_8 = arith.constant dense<0.000000e+00> : vector<16x128xf32>
    %14 = tpu.matmul %12, %13, %cst_8 {dimension_numbers = #tpu.dot_dimension_numbers<[1], [0], [0], [1], [0, 0, 1, 1], [], []>} : vector<16x512xbf16>, vector<512x128xbf16>, vector<16x128xf32> -> vector<16x128xf32>
    %c0_9 = arith.constant 0 : index
    %c0_10 = arith.constant 0 : index
    %15 = vector.load %arg4[%c0_9, %c0_10] : memref<16x128xf32, #tpu.memory_space<vmem>>, vector<16x128xf32>
    tpu.vector_store %arg4[%c0_9, %c0_10], %14 {strides = array<i32>} : memref<16x128xf32, #tpu.memory_space<vmem>>, vector<16x128xf32>,
    return
  }
  func.func @transform_0(%arg0: i32) -> (i32, i32) {
    %c0_i32 = arith.constant 0 : i32
    %c0_i32_0 = arith.constant 0 : i32
    return %arg0, %c0_i32 : i32, i32
  }
  func.func @transform_1(%arg0: i32) -> (i32, i32) {
    %c0_i32 = arith.constant 0 : i32
    %c0_i32_0 = arith.constant 0 : i32
    %c0_i32_1 = arith.constant 0 : i32
    return %c0_i32, %c0_i32_0 : i32, i32
  }
  func.func @transform_2(%arg0: i32) -> (i32, i32) {
    %c0_i32 = arith.constant 0 : i32
    %c0_i32_0 = arith.constant 0 : i32
    %c0_i32_1 = arith.constant 0 : i32
    return %c0_i32, %c0_i32_0 : i32, i32
  }
  func.func @transform_3(%arg0: i32) -> (i32, i32) {
    %c0_i32 = arith.constant 0 : i32
    %c0_i32_0 = arith.constant 0 : i32
    return %arg0, %c0_i32 : i32, i32
  }
}

</mosaic_0001>

<llo_original>
// kernel: tpu_custom_call.1
$region0: #{tpu_custom_call.1}
  #allocation0 [shape = 'u32[]', space=smem, size = 0x4, offset = 0x4, fixed_abs, tag = 'smem constant byte address 0x4 - core index']
  #allocation1 [shape = 'u32[72,128]{1,0:T(1,128)}', space=vmem, size = 0x9000, scoped, tag = 'internal scratch']
  %s0 = inlined_call_operand.hbm [shape: f32[16,128], index: 0, kind: input, shape index: {}]
  %s1 = inlined_call_operand.hbm [shape: bf16[128,512], index: 1, kind: input, shape index: {}]
  %s2 = inlined_call_operand.hbm [shape: bf16[512,128], index: 2, kind: input, shape index: {}]
  %s3 = inlined_call_operand.hbm [shape: f32[16,128], index: 3, kind: output, shape index: {}]
  %s4 = sld [smem:[#allocation0]]
  $region34: #{tpu_custom_call.1} parent=0
    _
  %s6 = ssub.s32 1, %s4
  %s7 = scalar_select 0, %s6, %s4
  $region1: #{tpu_custom_call.1} parent=0
    #allocation2 [shape = 'u8[8192]{0}', space=vmem, size = 0x2000, scoped, tag = 'input window, operand 0, single buffered']
    #allocation3 [shape = 's32[1]{0}', space=sflag, size = 0x4, scoped, tag = 'scoped memory for tpu_custom_call.1']
    #allocation4 [shape = 's32[1]{0}', space=sflag, size = 0x4, scoped, tag = 'scoped memory for tpu_custom_call.1']
    #allocation5 [shape = 'u8[131072]{0}', space=vmem, size = 0x20000, scoped, tag = 'input window, operand 1, single buffered']
    #allocation6 [shape = 's32[1]{0}', space=sflag, size = 0x4, scoped, tag = 'scoped memory for tpu_custom_call.1']
    #allocation7 [shape = 'u8[131072]{0}', space=vmem, size = 0x20000, scoped, tag = 'input window, operand 2, single buffered']
    #allocation8 [shape = 'u8[8192]{0}', space=vmem, size = 0x2000, scoped, tag = 'output window, operand 0, single buffered']
    %8 = vsyncpa [#allocation3], 0
    %9 = vsyncpa [#allocation6], 0
    %10 = vsyncpa [#allocation4], 0
    // Predicated region
    $region2: #{tpu_custom_call.1} parent=1 // pred_check
      _
    $region3: #{tpu_custom_call.1} parent=1 // pred_check_branch
      %12 = sbr.rel (0) target = $region5
    $region4: #{tpu_custom_call.1} parent=1 // pred_region
      %14 = vsyncadd [#allocation3], 0
      %s15 = sshll.u32 %s0, 4
      %s16 = int_to_ptr.hbm [resolvable:$true] %s15
      %s17 = sshll.u32 [#allocation2], 4
      %s18 = int_to_ptr.vmem [resolvable:$true] %s17
      %23 = dma.hbm_to_vmem [thread:$0]  %s16, 256, %s18, [#allocation3], 128, 128, 8
    $region5: #{tpu_custom_call.1} parent=1 // pred_fallthru
      _
    // Predicated region
    $region6: #{tpu_custom_call.1} parent=1 // pred_check
      _
    $region7: #{tpu_custom_call.1} parent=1 // pred_check_branch
      %25 = sbr.rel (0) target = $region9
    $region8: #{tpu_custom_call.1} parent=1 // pred_region
      %27 = vsyncadd [#allocation6], 0
      %s28 = sshll.u32 %s1, 4
      %s29 = int_to_ptr.hbm [resolvable:$true] %s28
      %s30 = sshll.u32 [#allocation5], 4
      %s31 = int_to_ptr.vmem [resolvable:$true] %s30
      %36 = dma.hbm_to_vmem [thread:$0]  %s29, 4096, %s31, [#allocation6], 256, 256, 16
    $region9: #{tpu_custom_call.1} parent=1 // pred_fallthru
      _
    // Predicated region
    $region10: #{tpu_custom_call.1} parent=1 // pred_check
      _
    $region11: #{tpu_custom_call.1} parent=1 // pred_check_branch
      %38 = sbr.rel (0) target = $region13
    $region12: #{tpu_custom_call.1} parent=1 // pred_region
      %40 = vsyncadd [#allocation6], 0
      %s41 = sshll.u32 %s2, 4
      %s42 = int_to_ptr.hbm [resolvable:$true] %s41
      %s43 = sshll.u32 [#allocation7], 4
      %s44 = int_to_ptr.vmem [resolvable:$true] %s43
      %49 = dma.hbm_to_vmem [thread:$0]  %s42, 4096, %s44, [#allocation6], 64, 64, 4
    $region13: #{tpu_custom_call.1} parent=1 // pred_fallthru
      _
    // Predicated region
    $region14: #{tpu_custom_call.1} parent=1 // pred_check
      _
    $region15: #{tpu_custom_call.1} parent=1 // pred_check_branch
      %51 = sbr.rel (0) target = $region17
    $region16: #{tpu_custom_call.1} parent=1 // pred_region
      %53 = dma.done [#allocation3], 256
    $region17: #{tpu_custom_call.1} parent=1 // pred_fallthru
      _
    // Predicated region
    $region18: #{tpu_custom_call.1} parent=1 // pred_check
      _
    $region19: #{tpu_custom_call.1} parent=1 // pred_check_branch
      %55 = sbr.rel (0) target = $region21
    $region20: #{tpu_custom_call.1} parent=1 // pred_region
      %57 = dma.done [#allocation6], 4096
    $region21: #{tpu_custom_call.1} parent=1 // pred_fallthru
      _
    // Predicated region
    $region22: #{tpu_custom_call.1} parent=1 // pred_check
      _
    $region23: #{tpu_custom_call.1} parent=1 // pred_check_branch
      %59 = sbr.rel (0) target = $region25
    $region24: #{tpu_custom_call.1} parent=1 // pred_region
      %61 = dma.done [#allocation6], 4096
    $region25: #{tpu_custom_call.1} parent=1 // pred_fallthru
      _
    %v62 = vld [vmem:[#allocation2] sm:$0xff]
    %v63 = vld [vmem:[#allocation2 + $0x8] sm:$0xff]
    %v64 = vpack.c.bf16 %v63, %v62
    %v65 = vld [vmem:[#allocation5] sm:$0xff]
    %v66 = vld [vmem:[#allocation5 + $0x8] sm:$0xff]
    %v67 = vld [vmem:[#allocation5 + $0x10] sm:$0xff]
    %v68 = vld [vmem:[#allocation5 + $0x18] sm:$0xff]
    %v69 = vld [vmem:[#allocation5 + $0x20] sm:$0xff]
    %v70 = vld [vmem:[#allocation5 + $0x28] sm:$0xff]
    %v71 = vld [vmem:[#allocation5 + $0x30] sm:$0xff]
    %v72 = vld [vmem:[#allocation5 + $0x38] sm:$0xff]
    %v73 = vld [vmem:[#allocation5 + $0x40] sm:$0xff]
    %v74 = vld [vmem:[#allocation5 + $0x48] sm:$0xff]
    %v75 = vld [vmem:[#allocation5 + $0x50] sm:$0xff]
    %v76 = vld [vmem:[#allocation5 + $0x58] sm:$0xff]
    %v77 = vld [vmem:[#allocation5 + $0x60] sm:$0xff]
    %v78 = vld [vmem:[#allocation5 + $0x68] sm:$0xff]
    %v79 = vld [vmem:[#allocation5 + $0x70] sm:$0xff]
    %v80 = vld [vmem:[#allocation5 + $0x78] sm:$0xff]
    %v81 = vld [vmem:[#allocation5 + $0x80] sm:$0xff]
    %v82 = vld [vmem:[#allocation5 + $0x88] sm:$0xff]
    %v83 = vld [vmem:[#allocation5 + $0x90] sm:$0xff]
    %v84 = vld [vmem:[#allocation5 + $0x98] sm:$0xff]
    %v85 = vld [vmem:[#allocation5 + $0xa0] sm:$0xff]
    %v86 = vld [vmem:[#allocation5 + $0xa8] sm:$0xff]
    %v87 = vld [vmem:[#allocation5 + $0xb0] sm:$0xff]
    %v88 = vld [vmem:[#allocation5 + $0xb8] sm:$0xff]
    %v89 = vld [vmem:[#allocation5 + $0xc0] sm:$0xff]
    %v90 = vld [vmem:[#allocation5 + $0xc8] sm:$0xff]
    %v91 = vld [vmem:[#allocation5 + $0xd0] sm:$0xff]
    %v92 = vld [vmem:[#allocation5 + $0xd8] sm:$0xff]
    %v93 = vld [vmem:[#allocation5 + $0xe0] sm:$0xff]
    %v94 = vld [vmem:[#allocation5 + $0xe8] sm:$0xff]
    %v95 = vld [vmem:[#allocation5 + $0xf0] sm:$0xff]
    %v96 = vld [vmem:[#allocation5 + $0xf8] sm:$0xff]
    %v129 = vunpack.c.l.b16 %v65
    %v130 = vunpack.c.h.b16 %v65
    %v131 = vunpack.c.l.b16 %v66
    %v132 = vunpack.c.h.b16 %v66
    %v133 = vunpack.c.l.b16 %v67
    %v134 = vunpack.c.h.b16 %v67
    %v135 = vunpack.c.l.b16 %v68
    %v136 = vunpack.c.h.b16 %v68
    %v137 = vunpack.c.l.b16 %v69
    %v138 = vunpack.c.h.b16 %v69
    %v139 = vunpack.c.l.b16 %v70
    %v140 = vunpack.c.h.b16 %v70
    %v141 = vunpack.c.l.b16 %v71
    %v142 = vunpack.c.h.b16 %v71
    %v143 = vunpack.c.l.b16 %v72
    %v144 = vunpack.c.h.b16 %v72
    %v145 = vunpack.c.l.b16 %v73
    %v146 = vunpack.c.h.b16 %v73
    %v147 = vunpack.c.l.b16 %v74
    %v148 = vunpack.c.h.b16 %v74
    %v149 = vunpack.c.l.b16 %v75
    %v150 = vunpack.c.h.b16 %v75
    %v151 = vunpack.c.l.b16 %v76
    %v152 = vunpack.c.h.b16 %v76
    %v153 = vunpack.c.l.b16 %v77
    %v154 = vunpack.c.h.b16 %v77
    %v155 = vunpack.c.l.b16 %v78
    %v156 = vunpack.c.h.b16 %v78
    %v157 = vunpack.c.l.b16 %v79
    %v158 = vunpack.c.h.b16 %v79
    %v159 = vunpack.c.l.b16 %v80
    %v160 = vunpack.c.h.b16 %v80
    %v161 = vunpack.c.l.b16 %v81
    %v162 = vunpack.c.h.b16 %v81
    %v163 = vunpack.c.l.b16 %v82
    %v164 = vunpack.c.h.b16 %v82
    %v165 = vunpack.c.l.b16 %v83
    %v166 = vunpack.c.h.b16 %v83
    %v167 = vunpack.c.l.b16 %v84
    %v168 = vunpack.c.h.b16 %v84
    %v169 = vunpack.c.l.b16 %v85
    %v170 = vunpack.c.h.b16 %v85
    %v171 = vunpack.c.l.b16 %v86
    %v172 = vunpack.c.h.b16 %v86
    %v173 = vunpack.c.l.b16 %v87
    %v174 = vunpack.c.h.b16 %v87
    %v175 = vunpack.c.l.b16 %v88
    %v176 = vunpack.c.h.b16 %v88
    %v177 = vunpack.c.l.b16 %v89
    %v178 = vunpack.c.h.b16 %v89
    %v179 = vunpack.c.l.b16 %v90
    %v180 = vunpack.c.h.b16 %v90
    %v181 = vunpack.c.l.b16 %v91
    %v182 = vunpack.c.h.b16 %v91
    %v183 = vunpack.c.l.b16 %v92
    %v184 = vunpack.c.h.b16 %v92
    %v185 = vunpack.c.l.b16 %v93
    %v186 = vunpack.c.h.b16 %v93
    %v187 = vunpack.c.l.b16 %v94
    %v188 = vunpack.c.h.b16 %v94
    %v189 = vunpack.c.l.b16 %v95
    %v190 = vunpack.c.h.b16 %v95
    %v191 = vunpack.c.l.b16 %v96
    %v192 = vunpack.c.h.b16 %v96
    %v193 = vpack.c.b16 %v133, %v129
    %v194 = vpack.c.b16 %v134, %v130
    %v195 = vpack.c.b16 %v135, %v131
    %v196 = vpack.c.b16 %v136, %v132
    %v197 = vpack.c.b16 %v141, %v137
    %v198 = vpack.c.b16 %v142, %v138
    %v199 = vpack.c.b16 %v143, %v139
    %v200 = vpack.c.b16 %v144, %v140
    %v201 = vpack.c.b16 %v149, %v145
    %v202 = vpack.c.b16 %v150, %v146
    %v203 = vpack.c.b16 %v151, %v147
    %v204 = vpack.c.b16 %v152, %v148
    %v205 = vpack.c.b16 %v157, %v153
    %v206 = vpack.c.b16 %v158, %v154
    %v207 = vpack.c.b16 %v159, %v155
    %v208 = vpack.c.b16 %v160, %v156
    %v209 = vpack.c.b16 %v165, %v161
    %v210 = vpack.c.b16 %v166, %v162
    %v211 = vpack.c.b16 %v167, %v163
    %v212 = vpack.c.b16 %v168, %v164
    %v213 = vpack.c.b16 %v173, %v169
    %v214 = vpack.c.b16 %v174, %v170
    %v215 = vpack.c.b16 %v175, %v171
    %v216 = vpack.c.b16 %v176, %v172
    %v217 = vpack.c.b16 %v181, %v177
    %v218 = vpack.c.b16 %v182, %v178
    %v219 = vpack.c.b16 %v183, %v179
    %v220 = vpack.c.b16 %v184, %v180
    %v221 = vpack.c.b16 %v189, %v185
    %v222 = vpack.c.b16 %v190, %v186
    %v223 = vpack.c.b16 %v191, %v187
    %v224 = vpack.c.b16 %v192, %v188
    %257 = vmatpush.bf16.msra.mxu0 %v221
    %258 = vmatpush.bf16.msra.mxu0 %v217
    %259 = vmatpush.bf16.msra.mxu0 %v213
    %260 = vmatpush.bf16.msra.mxu0 %v209
    %261 = vmatpush.bf16.msra.mxu0 %v205
    %262 = vmatpush.bf16.msra.mxu0 %v201
    %263 = vmatpush.bf16.msra.mxu0 %v197
    %264 = vmatpush.bf16.msra.mxu0 %v193
    %265 = vmatmul.bf16.gmra.mxu0 %v64
    %v266 = vpop.f32.mrf.mxu0
    %v267 = vadd.f32 0.0, %v266
    %v268 = vpop.f32.mrf.mxu0
    %v269 = vadd.f32 0.0, %v268
    %270 = vdwg.mxu0
    %271 = vmatpush.bf16.msra.mxu0 %v222
    %272 = vmatpush.bf16.msra.mxu0 %v218
    %273 = vmatpush.bf16.msra.mxu0 %v214
    %274 = vmatpush.bf16.msra.mxu0 %v210
    %275 = vmatpush.bf16.msra.mxu0 %v206
    %276 = vmatpush.bf16.msra.mxu0 %v202
    %277 = vmatpush.bf16.msra.mxu0 %v198
    %278 = vmatpush.bf16.msra.mxu0 %v194
    %279 = vmatmul.bf16.gmra.mxu0 %v64
    %v280 = vpop.f32.mrf.mxu0
    %v281 = vadd.f32 0.0, %v280
    %v282 = vpop.f32.mrf.mxu0
    %v283 = vadd.f32 0.0, %v282
    %284 = vdwg.mxu0
    %285 = vmatpush.bf16.msra.mxu0 %v223
    %286 = vmatpush.bf16.msra.mxu0 %v219
    %287 = vmatpush.bf16.msra.mxu0 %v215
    %288 = vmatpush.bf16.msra.mxu0 %v211
    %289 = vmatpush.bf16.msra.mxu0 %v207
    %290 = vmatpush.bf16.msra.mxu0 %v203
    %291 = vmatpush.bf16.msra.mxu0 %v199
    %292 = vmatpush.bf16.msra.mxu0 %v195
    %293 = vmatmul.bf16.gmra.mxu0 %v64
    %v294 = vpop.f32.mrf.mxu0
    %v295 = vadd.f32 0.0, %v294
    %v296 = vpop.f32.mrf.mxu0
    %v297 = vadd.f32 0.0, %v296
    %298 = vdwg.mxu0
    %299 = vmatpush.bf16.msra.mxu0 %v224
    %300 = vmatpush.bf16.msra.mxu0 %v220
    %301 = vmatpush.bf16.msra.mxu0 %v216
    %302 = vmatpush.bf16.msra.mxu0 %v212
    %303 = vmatpush.bf16.msra.mxu0 %v208
    %304 = vmatpush.bf16.msra.mxu0 %v204
    %305 = vmatpush.bf16.msra.mxu0 %v200
    %306 = vmatpush.bf16.msra.mxu0 %v196
    %307 = vmatmul.bf16.gmra.mxu0 %v64
    %v308 = vpop.f32.mrf.mxu0
    %v309 = vadd.f32 0.0, %v308
    %v310 = vpop.f32.mrf.mxu0
    %v311 = vadd.f32 0.0, %v310
    %312 = vdwg.mxu0
    %v313 = vmul.f32 %v267, 0.5
    %v314 = vmul.f32 %v281, 0.5
    %v315 = vmul.f32 %v295, 0.5
    %v316 = vmul.f32 %v309, 0.5
    %v317 = vmul.f32 %v269, 0.5
    %v318 = vmul.f32 %v283, 0.5
    %v319 = vmul.f32 %v297, 0.5
    %v320 = vmul.f32 %v311, 0.5
    %v321 = vmul.f32 %v267, 0.70710677
    %v322 = vmul.f32 %v281, 0.70710677
    %v323 = vmul.f32 %v295, 0.70710677
    %v324 = vmul.f32 %v309, 0.70710677
    %v325 = vmul.f32 %v269, 0.70710677
    %v326 = vmul.f32 %v283, 0.70710677
    %v327 = vmul.f32 %v297, 0.70710677
    %v328 = vmul.f32 %v311, 0.70710677
    %v329 = vmul.f32 %v321, %v321
    %v330 = vmin.f32 16.0, %v329
    %v331 = vmul.f32 %v330, 2.1237322e-06
    %v332 = vadd.f32 %v331, 0.00028619796
    %v333 = vmul.f32 %v330, %v332
    %v334 = vadd.f32 %v333, 0.0036580483
    %v335 = vmul.f32 %v330, %v334
    %v336 = vadd.f32 %v335, 0.05243302
    %v337 = vmul.f32 %v330, %v336
    %v338 = vadd.f32 %v337, 0.18741608
    %v339 = vmul.f32 %v330, %v338
    %v340 = vadd.f32 %v339, 1.1283791
    %v341 = vmul.f32 %v321, %v340
    %v342 = vmul.f32 %v330, 3.8918573e-05
    %v343 = vadd.f32 %v342, 0.001143296
    %v344 = vmul.f32 %v330, %v343
    %v345 = vadd.f32 %v344, 0.014752088
    %v346 = vmul.f32 %v330, %v345
    %v347 = vadd.f32 %v346, 0.112945676
    %v348 = vmul.f32 %v330, %v347
    %v349 = vadd.f32 %v348, 0.4994258
    %v350 = vmul.f32 %v330, %v349
    %v351 = vadd.f32 %v350, 1.0
    %v352 = vrcp.pop %v351
    %v353 = vmul.f32 %v351, %v352
    %v354 = vsub.f32 1.0, %v353
    %v355 = vmul.f32 %v352, %v354
    %v356 = vadd.f32 %v352, %v355
    %vm357 = vweird.f32 %v351
    %vm358 = vweird.f32 %v352
    %vm359 = vmor %vm357, %vm358
    %v360 = vsel %vm359, %v352, %v356
    %v361 = vand.u32 2147483647, %v351
    %vm362 = vcmp.eq.f32.partialorder %v361, 8.507059e+37
    %v363 = vand.u32 %v351, 2147483648
    %v364 = vor.u32 1.1754944e-38, %v363
    %v365 = vsel %vm362, %v364, %v360
    %v366 = vmul.f32 %v341, %v365
    %v367 = vmin.f32 %v366, 1.0
    %v368 = vmax.f32 %v367, -1.0
    %v369 = vmul.f32 %v322, %v322
    %v370 = vmin.f32 16.0, %v369
    %v371 = vmul.f32 %v370, 2.1237322e-06
    %v372 = vadd.f32 %v371, 0.00028619796
    %v373 = vmul.f32 %v370, %v372
    %v374 = vadd.f32 %v373, 0.0036580483
    %v375 = vmul.f32 %v370, %v374
    %v376 = vadd.f32 %v375, 0.05243302
    %v377 = vmul.f32 %v370, %v376
    %v378 = vadd.f32 %v377, 0.18741608
    %v379 = vmul.f32 %v370, %v378
    %v380 = vadd.f32 %v379, 1.1283791
    %v381 = vmul.f32 %v322, %v380
    %v382 = vmul.f32 %v370, 3.8918573e-05
    %v383 = vadd.f32 %v382, 0.001143296
    %v384 = vmul.f32 %v370, %v383
    %v385 = vadd.f32 %v384, 0.014752088
    %v386 = vmul.f32 %v370, %v385
    %v387 = vadd.f32 %v386, 0.112945676
    %v388 = vmul.f32 %v370, %v387
    %v389 = vadd.f32 %v388, 0.4994258
    %v390 = vmul.f32 %v370, %v389
    %v391 = vadd.f32 %v390, 1.0
    %v392 = vrcp.pop %v391
    %v393 = vmul.f32 %v391, %v392
    %v394 = vsub.f32 1.0, %v393
    %v395 = vmul.f32 %v392, %v394
    %v396 = vadd.f32 %v392, %v395
    %vm397 = vweird.f32 %v391
    %vm398 = vweird.f32 %v392
    %vm399 = vmor %vm397, %vm398
    %v400 = vsel %vm399, %v392, %v396
    %v401 = vand.u32 2147483647, %v391
    %vm402 = vcmp.eq.f32.partialorder %v401, 8.507059e+37
    %v403 = vand.u32 %v391, 2147483648
    %v404 = vor.u32 1.1754944e-38, %v403
    %v405 = vsel %vm402, %v404, %v400
    %v406 = vmul.f32 %v381, %v405
    %v407 = vmin.f32 %v406, 1.0
    %v408 = vmax.f32 %v407, -1.0
    %v409 = vmul.f32 %v323, %v323
    %v410 = vmin.f32 16.0, %v409
    %v411 = vmul.f32 %v410, 2.1237322e-06
    %v412 = vadd.f32 %v411, 0.00028619796
    %v413 = vmul.f32 %v410, %v412
    %v414 = vadd.f32 %v413, 0.0036580483
    %v415 = vmul.f32 %v410, %v414
    %v416 = vadd.f32 %v415, 0.05243302
    %v417 = vmul.f32 %v410, %v416
    %v418 = vadd.f32 %v417, 0.18741608
    %v419 = vmul.f32 %v410, %v418
    %v420 = vadd.f32 %v419, 1.1283791
    %v421 = vmul.f32 %v323, %v420
    %v422 = vmul.f32 %v410, 3.8918573e-05
    %v423 = vadd.f32 %v422, 0.001143296
    %v424 = vmul.f32 %v410, %v423
    %v425 = vadd.f32 %v424, 0.014752088
    %v426 = vmul.f32 %v410, %v425
    %v427 = vadd.f32 %v426, 0.112945676
    %v428 = vmul.f32 %v410, %v427
    %v429 = vadd.f32 %v428, 0.4994258
    %v430 = vmul.f32 %v410, %v429
    %v431 = vadd.f32 %v430, 1.0
    %v432 = vrcp.pop %v431
    %v433 = vmul.f32 %v431, %v432
    %v434 = vsub.f32 1.0, %v433
    %v435 = vmul.f32 %v432, %v434
    %v436 = vadd.f32 %v432, %v435
    %vm437 = vweird.f32 %v431
    %vm438 = vweird.f32 %v432
    %vm439 = vmor %vm437, %vm438
    %v440 = vsel %vm439, %v432, %v436
    %v441 = vand.u32 2147483647, %v431
    %vm442 = vcmp.eq.f32.partialorder %v441, 8.507059e+37
    %v443 = vand.u32 %v431, 2147483648
    %v444 = vor.u32 1.1754944e-38, %v443
    %v445 = vsel %vm442, %v444, %v440
    %v446 = vmul.f32 %v421, %v445
    %v447 = vmin.f32 %v446, 1.0
    %v448 = vmax.f32 %v447, -1.0
    %v449 = vmul.f32 %v324, %v324
    %v450 = vmin.f32 16.0, %v449
    %v451 = vmul.f32 %v450, 2.1237322e-06
    %v452 = vadd.f32 %v451, 0.00028619796
    %v453 = vmul.f32 %v450, %v452
    %v454 = vadd.f32 %v453, 0.0036580483
    %v455 = vmul.f32 %v450, %v454
    %v456 = vadd.f32 %v455, 0.05243302
    %v457 = vmul.f32 %v450, %v456
    %v458 = vadd.f32 %v457, 0.18741608
    %v459 = vmul.f32 %v450, %v458
    %v460 = vadd.f32 %v459, 1.1283791
    %v461 = vmul.f32 %v324, %v460
    %v462 = vmul.f32 %v450, 3.8918573e-05
    %v463 = vadd.f32 %v462, 0.001143296
    %v464 = vmul.f32 %v450, %v463
    %v465 = vadd.f32 %v464, 0.014752088
    %v466 = vmul.f32 %v450, %v465
    %v467 = vadd.f32 %v466, 0.112945676
    %v468 = vmul.f32 %v450, %v467
    %v469 = vadd.f32 %v468, 0.4994258
    %v470 = vmul.f32 %v450, %v469
    %v471 = vadd.f32 %v470, 1.0
    %v472 = vrcp.pop %v471
    %v473 = vmul.f32 %v471, %v472
    %v474 = vsub.f32 1.0, %v473
    %v475 = vmul.f32 %v472, %v474
    %v476 = vadd.f32 %v472, %v475
    %vm477 = vweird.f32 %v471
    %vm478 = vweird.f32 %v472
    %vm479 = vmor %vm477, %vm478
    %v480 = vsel %vm479, %v472, %v476
    %v481 = vand.u32 2147483647, %v471
    %vm482 = vcmp.eq.f32.partialorder %v481, 8.507059e+37
    %v483 = vand.u32 %v471, 2147483648
    %v484 = vor.u32 1.1754944e-38, %v483
    %v485 = vsel %vm482, %v484, %v480
    %v486 = vmul.f32 %v461, %v485
    %v487 = vmin.f32 %v486, 1.0
    %v488 = vmax.f32 %v487, -1.0
    %v489 = vmul.f32 %v325, %v325
    %v490 = vmin.f32 16.0, %v489
    %v491 = vmul.f32 %v490, 2.1237322e-06
    %v492 = vadd.f32 %v491, 0.00028619796
    %v493 = vmul.f32 %v490, %v492
    %v494 = vadd.f32 %v493, 0.0036580483
    %v495 = vmul.f32 %v490, %v494
    %v496 = vadd.f32 %v495, 0.05243302
    %v497 = vmul.f32 %v490, %v496
    %v498 = vadd.f32 %v497, 0.18741608
    %v499 = vmul.f32 %v490, %v498
    %v500 = vadd.f32 %v499, 1.1283791
    %v501 = vmul.f32 %v325, %v500
    %v502 = vmul.f32 %v490, 3.8918573e-05
    %v503 = vadd.f32 %v502, 0.001143296
    %v504 = vmul.f32 %v490, %v503
    %v505 = vadd.f32 %v504, 0.014752088
    %v506 = vmul.f32 %v490, %v505
    %v507 = vadd.f32 %v506, 0.112945676
    %v508 = vmul.f32 %v490, %v507
    %v509 = vadd.f32 %v508, 0.4994258
    %v510 = vmul.f32 %v490, %v509
    %v511 = vadd.f32 %v510, 1.0
    %v512 = vrcp.pop %v511
    %v513 = vmul.f32 %v511, %v512
    %v514 = vsub.f32 1.0, %v513
    %v515 = vmul.f32 %v512, %v514
    %v516 = vadd.f32 %v512, %v515
    %vm517 = vweird.f32 %v511
    %vm518 = vweird.f32 %v512
    %vm519 = vmor %vm517, %vm518
    %v520 = vsel %vm519, %v512, %v516
    %v521 = vand.u32 2147483647, %v511
    %vm522 = vcmp.eq.f32.partialorder %v521, 8.507059e+37
    %v523 = vand.u32 %v511, 2147483648
    %v524 = vor.u32 1.1754944e-38, %v523
    %v525 = vsel %vm522, %v524, %v520
    %v526 = vmul.f32 %v501, %v525
    %v527 = vmin.f32 %v526, 1.0
    %v528 = vmax.f32 %v527, -1.0
    %v529 = vmul.f32 %v326, %v326
    %v530 = vmin.f32 16.0, %v529
    %v531 = vmul.f32 %v530, 2.1237322e-06
    %v532 = vadd.f32 %v531, 0.00028619796
    %v533 = vmul.f32 %v530, %v532
    %v534 = vadd.f32 %v533, 0.0036580483
    %v535 = vmul.f32 %v530, %v534
    %v536 = vadd.f32 %v535, 0.05243302
    %v537 = vmul.f32 %v530, %v536
    %v538 = vadd.f32 %v537, 0.18741608
    %v539 = vmul.f32 %v530, %v538
    %v540 = vadd.f32 %v539, 1.1283791
    %v541 = vmul.f32 %v326, %v540
    %v542 = vmul.f32 %v530, 3.8918573e-05
    %v543 = vadd.f32 %v542, 0.001143296
    %v544 = vmul.f32 %v530, %v543
    %v545 = vadd.f32 %v544, 0.014752088
    %v546 = vmul.f32 %v530, %v545
    %v547 = vadd.f32 %v546, 0.112945676
    %v548 = vmul.f32 %v530, %v547
    %v549 = vadd.f32 %v548, 0.4994258
    %v550 = vmul.f32 %v530, %v549
    %v551 = vadd.f32 %v550, 1.0
    %v552 = vrcp.pop %v551
    %v553 = vmul.f32 %v551, %v552
    %v554 = vsub.f32 1.0, %v553
    %v555 = vmul.f32 %v552, %v554
    %v556 = vadd.f32 %v552, %v555
    %vm557 = vweird.f32 %v551
    %vm558 = vweird.f32 %v552
    %vm559 = vmor %vm557, %vm558
    %v560 = vsel %vm559, %v552, %v556
    %v561 = vand.u32 2147483647, %v551
    %vm562 = vcmp.eq.f32.partialorder %v561, 8.507059e+37
    %v563 = vand.u32 %v551, 2147483648
    %v564 = vor.u32 1.1754944e-38, %v563
    %v565 = vsel %vm562, %v564, %v560
    %v566 = vmul.f32 %v541, %v565
    %v567 = vmin.f32 %v566, 1.0
    %v568 = vmax.f32 %v567, -1.0
    %v569 = vmul.f32 %v327, %v327
    %v570 = vmin.f32 16.0, %v569
    %v571 = vmul.f32 %v570, 2.1237322e-06
    %v572 = vadd.f32 %v571, 0.00028619796
    %v573 = vmul.f32 %v570, %v572
    %v574 = vadd.f32 %v573, 0.0036580483
    %v575 = vmul.f32 %v570, %v574
    %v576 = vadd.f32 %v575, 0.05243302
    %v577 = vmul.f32 %v570, %v576
    %v578 = vadd.f32 %v577, 0.18741608
    %v579 = vmul.f32 %v570, %v578
    %v580 = vadd.f32 %v579, 1.1283791
    %v581 = vmul.f32 %v327, %v580
    %v582 = vmul.f32 %v570, 3.8918573e-05
    %v583 = vadd.f32 %v582, 0.001143296
    %v584 = vmul.f32 %v570, %v583
    %v585 = vadd.f32 %v584, 0.014752088
    %v586 = vmul.f32 %v570, %v585
    %v587 = vadd.f32 %v586, 0.112945676
    %v588 = vmul.f32 %v570, %v587
    %v589 = vadd.f32 %v588, 0.4994258
    %v590 = vmul.f32 %v570, %v589
    %v591 = vadd.f32 %v590, 1.0
    %v592 = vrcp.pop %v591
    %v593 = vmul.f32 %v591, %v592
    %v594 = vsub.f32 1.0, %v593
    %v595 = vmul.f32 %v592, %v594
    %v596 = vadd.f32 %v592, %v595
    %vm597 = vweird.f32 %v591
    %vm598 = vweird.f32 %v592
    %vm599 = vmor %vm597, %vm598
    %v600 = vsel %vm599, %v592, %v596
    %v601 = vand.u32 2147483647, %v591
    %vm602 = vcmp.eq.f32.partialorder %v601, 8.507059e+37
    %v603 = vand.u32 %v591, 2147483648
    %v604 = vor.u32 1.1754944e-38, %v603
    %v605 = vsel %vm602, %v604, %v600
    %v606 = vmul.f32 %v581, %v605
    %v607 = vmin.f32 %v606, 1.0
    %v608 = vmax.f32 %v607, -1.0
    %v609 = vmul.f32 %v328, %v328
    %v610 = vmin.f32 16.0, %v609
    %v611 = vmul.f32 %v610, 2.1237322e-06
    %v612 = vadd.f32 %v611, 0.00028619796
    %v613 = vmul.f32 %v610, %v612
    %v614 = vadd.f32 %v613, 0.0036580483
    %v615 = vmul.f32 %v610, %v614
    %v616 = vadd.f32 %v615, 0.05243302
    %v617 = vmul.f32 %v610, %v616
    %v618 = vadd.f32 %v617, 0.18741608
    %v619 = vmul.f32 %v610, %v618
    %v620 = vadd.f32 %v619, 1.1283791
    %v621 = vmul.f32 %v328, %v620
    %v622 = vmul.f32 %v610, 3.8918573e-05
    %v623 = vadd.f32 %v622, 0.001143296
    %v624 = vmul.f32 %v610, %v623
    %v625 = vadd.f32 %v624, 0.014752088
    %v626 = vmul.f32 %v610, %v625
    %v627 = vadd.f32 %v626, 0.112945676
    %v628 = vmul.f32 %v610, %v627
    %v629 = vadd.f32 %v628, 0.4994258
    %v630 = vmul.f32 %v610, %v629
    %v631 = vadd.f32 %v630, 1.0
    %v632 = vrcp.pop %v631
    %v633 = vmul.f32 %v631, %v632
    %v634 = vsub.f32 1.0, %v633
    %v635 = vmul.f32 %v632, %v634
    %v636 = vadd.f32 %v632, %v635
    %vm637 = vweird.f32 %v631
    %vm638 = vweird.f32 %v632
    %vm639 = vmor %vm637, %vm638
    %v640 = vsel %vm639, %v632, %v636
    %v641 = vand.u32 2147483647, %v631
    %vm642 = vcmp.eq.f32.partialorder %v641, 8.507059e+37
    %v643 = vand.u32 %v631, 2147483648
    %v644 = vor.u32 1.1754944e-38, %v643
    %v645 = vsel %vm642, %v644, %v640
    %v646 = vmul.f32 %v621, %v645
    %v647 = vmin.f32 %v646, 1.0
    %v648 = vmax.f32 %v647, -1.0
    %v649 = vadd.f32 %v368, 1.0
    %v650 = vadd.f32 %v408, 1.0
    %v651 = vadd.f32 %v448, 1.0
    %v652 = vadd.f32 %v488, 1.0
    %v653 = vadd.f32 %v528, 1.0
    %v654 = vadd.f32 %v568, 1.0
    %v655 = vadd.f32 %v608, 1.0
    %v656 = vadd.f32 %v648, 1.0
    %v657 = vmul.f32 %v313, %v649
    %v658 = vmul.f32 %v314, %v650
    %v659 = vmul.f32 %v315, %v651
    %v660 = vmul.f32 %v316, %v652
    %v661 = vmul.f32 %v317, %v653
    %v662 = vmul.f32 %v318, %v654
    %v663 = vmul.f32 %v319, %v655
    %v664 = vmul.f32 %v320, %v656
    %v665 = vpack.c.bf16 %v661, %v657
    %v666 = vpack.c.bf16 %v662, %v658
    %v667 = vpack.c.bf16 %v663, %v659
    %v668 = vpack.c.bf16 %v664, %v660
    %v669 = vld [vmem:[#allocation7] sm:$0xf]
    %v670 = vld [vmem:[#allocation7 + $0x4] sm:$0xf]
    %v671 = vld [vmem:[#allocation7 + $0x8] sm:$0xf]
    %v672 = vld [vmem:[#allocation7 + $0xc] sm:$0xf]
    %v673 = vld [vmem:[#allocation7 + $0x10] sm:$0xf]
    %v674 = vld [vmem:[#allocation7 + $0x14] sm:$0xf]
    %v675 = vld [vmem:[#allocation7 + $0x18] sm:$0xf]
    %v676 = vld [vmem:[#allocation7 + $0x1c] sm:$0xf]
    %v677 = vld [vmem:[#allocation7 + $0x20] sm:$0xf]
    %v678 = vld [vmem:[#allocation7 + $0x24] sm:$0xf]
    %v679 = vld [vmem:[#allocation7 + $0x28] sm:$0xf]
    %v680 = vld [vmem:[#allocation7 + $0x2c] sm:$0xf]
    %v681 = vld [vmem:[#allocation7 + $0x30] sm:$0xf]
    %v682 = vld [vmem:[#allocation7 + $0x34] sm:$0xf]
    %v683 = vld [vmem:[#allocation7 + $0x38] sm:$0xf]
    %v684 = vld [vmem:[#allocation7 + $0x3c] sm:$0xf]
    %v685 = vld [vmem:[#allocation7 + $0x40] sm:$0xf]
    %v686 = vld [vmem:[#allocation7 + $0x44] sm:$0xf]
    %v687 = vld [vmem:[#allocation7 + $0x48] sm:$0xf]
    %v688 = vld [vmem:[#allocation7 + $0x4c] sm:$0xf]
    %v689 = vld [vmem:[#allocation7 + $0x50] sm:$0xf]
    %v690 = vld [vmem:[#allocation7 + $0x54] sm:$0xf]
    %v691 = vld [vmem:[#allocation7 + $0x58] sm:$0xf]
    %v692 = vld [vmem:[#allocation7 + $0x5c] sm:$0xf]
    %v693 = vld [vmem:[#allocation7 + $0x60] sm:$0xf]
    %v694 = vld [vmem:[#allocation7 + $0x64] sm:$0xf]
    %v695 = vld [vmem:[#allocation7 + $0x68] sm:$0xf]
    %v696 = vld [vmem:[#allocation7 + $0x6c] sm:$0xf]
    %v697 = vld [vmem:[#allocation7 + $0x70] sm:$0xf]
    %v698 = vld [vmem:[#allocation7 + $0x74] sm:$0xf]
    %v699 = vld [vmem:[#allocation7 + $0x78] sm:$0xf]
    %v700 = vld [vmem:[#allocation7 + $0x7c] sm:$0xf]
    %v701 = vld [vmem:[#allocation7 + $0x80] sm:$0xf]
    %v702 = vld [vmem:[#allocation7 + $0x84] sm:$0xf]
    %v703 = vld [vmem:[#allocation7 + $0x88] sm:$0xf]
    %v704 = vld [vmem:[#allocation7 + $0x8c] sm:$0xf]
    %v705 = vld [vmem:[#allocation7 + $0x90] sm:$0xf]
    %v706 = vld [vmem:[#allocation7 + $0x94] sm:$0xf]
    %v707 = vld [vmem:[#allocation7 + $0x98] sm:$0xf]
    %v708 = vld [vmem:[#allocation7 + $0x9c] sm:$0xf]
    %v709 = vld [vmem:[#allocation7 + $0xa0] sm:$0xf]
    %v710 = vld [vmem:[#allocation7 + $0xa4] sm:$0xf]
    %v711 = vld [vmem:[#allocation7 + $0xa8] sm:$0xf]
    %v712 = vld [vmem:[#allocation7 + $0xac] sm:$0xf]
    %v713 = vld [vmem:[#allocation7 + $0xb0] sm:$0xf]
    %v714 = vld [vmem:[#allocation7 + $0xb4] sm:$0xf]
    %v715 = vld [vmem:[#allocation7 + $0xb8] sm:$0xf]
    %v716 = vld [vmem:[#allocation7 + $0xbc] sm:$0xf]
    %v717 = vld [vmem:[#allocation7 + $0xc0] sm:$0xf]
    %v718 = vld [vmem:[#allocation7 + $0xc4] sm:$0xf]
    %v719 = vld [vmem:[#allocation7 + $0xc8] sm:$0xf]
    %v720 = vld [vmem:[#allocation7 + $0xcc] sm:$0xf]
    %v721 = vld [vmem:[#allocation7 + $0xd0] sm:$0xf]
    %v722 = vld [vmem:[#allocation7 + $0xd4] sm:$0xf]
    %v723 = vld [vmem:[#allocation7 + $0xd8] sm:$0xf]
    %v724 = vld [vmem:[#allocation7 + $0xdc] sm:$0xf]
    %v725 = vld [vmem:[#allocation7 + $0xe0] sm:$0xf]
    %v726 = vld [vmem:[#allocation7 + $0xe4] sm:$0xf]
    %v727 = vld [vmem:[#allocation7 + $0xe8] sm:$0xf]
    %v728 = vld [vmem:[#allocation7 + $0xec] sm:$0xf]
    %v729 = vld [vmem:[#allocation7 + $0xf0] sm:$0xf]
    %v730 = vld [vmem:[#allocation7 + $0xf4] sm:$0xf]
    %v731 = vld [vmem:[#allocation7 + $0xf8] sm:$0xf]
    %v732 = vld [vmem:[#allocation7 + $0xfc] sm:$0xf]
    %v797 = vunpack.c.l.b16 %v669
    %v798 = vunpack.c.l.b16 %v670
    %v799 = vunpack.c.l.b16 %v671
    %v800 = vunpack.c.l.b16 %v672
    %v801 = vunpack.c.l.b16 %v673
    %v802 = vunpack.c.l.b16 %v674
    %v803 = vunpack.c.l.b16 %v675
    %v804 = vunpack.c.l.b16 %v676
    %v805 = vunpack.c.l.b16 %v677
    %v806 = vunpack.c.l.b16 %v678
    %v807 = vunpack.c.l.b16 %v679
    %v808 = vunpack.c.l.b16 %v680
    %v809 = vunpack.c.l.b16 %v681
    %v810 = vunpack.c.l.b16 %v682
    %v811 = vunpack.c.l.b16 %v683
    %v812 = vunpack.c.l.b16 %v684
    %v813 = vunpack.c.l.b16 %v685
    %v814 = vunpack.c.l.b16 %v686
    %v815 = vunpack.c.l.b16 %v687
    %v816 = vunpack.c.l.b16 %v688
    %v817 = vunpack.c.l.b16 %v689
    %v818 = vunpack.c.l.b16 %v690
    %v819 = vunpack.c.l.b16 %v691
    %v820 = vunpack.c.l.b16 %v692
    %v821 = vunpack.c.l.b16 %v693
    %v822 = vunpack.c.l.b16 %v694
    %v823 = vunpack.c.l.b16 %v695
    %v824 = vunpack.c.l.b16 %v696
    %v825 = vunpack.c.l.b16 %v697
    %v826 = vunpack.c.l.b16 %v698
    %v827 = vunpack.c.l.b16 %v699
    %v828 = vunpack.c.l.b16 %v700
    %v829 = vunpack.c.l.b16 %v701
    %v830 = vunpack.c.l.b16 %v702
    %v831 = vunpack.c.l.b16 %v703
    %v832 = vunpack.c.l.b16 %v704
    %v833 = vunpack.c.l.b16 %v705
    %v834 = vunpack.c.l.b16 %v706
    %v835 = vunpack.c.l.b16 %v707
    %v836 = vunpack.c.l.b16 %v708
    %v837 = vunpack.c.l.b16 %v709
    %v838 = vunpack.c.l.b16 %v710
    %v839 = vunpack.c.l.b16 %v711
    %v840 = vunpack.c.l.b16 %v712
    %v841 = vunpack.c.l.b16 %v713
    %v842 = vunpack.c.l.b16 %v714
    %v843 = vunpack.c.l.b16 %v715
    %v844 = vunpack.c.l.b16 %v716
    %v845 = vunpack.c.l.b16 %v717
    %v846 = vunpack.c.l.b16 %v718
    %v847 = vunpack.c.l.b16 %v719
    %v848 = vunpack.c.l.b16 %v720
    %v849 = vunpack.c.l.b16 %v721
    %v850 = vunpack.c.l.b16 %v722
    %v851 = vunpack.c.l.b16 %v723
    %v852 = vunpack.c.l.b16 %v724
    %v853 = vunpack.c.l.b16 %v725
    %v854 = vunpack.c.l.b16 %v726
    %v855 = vunpack.c.l.b16 %v727
    %v856 = vunpack.c.l.b16 %v728
    %v857 = vunpack.c.l.b16 %v729
    %v858 = vunpack.c.l.b16 %v730
    %v859 = vunpack.c.l.b16 %v731
    %v860 = vunpack.c.l.b16 %v732
    %v861 = vpack.c.b16 %v798, %v797
    %v862 = vpack.c.b16 %v800, %v799
    %v863 = vpack.c.b16 %v802, %v801
    %v864 = vpack.c.b16 %v804, %v803
    %v865 = vpack.c.b16 %v806, %v805
    %v866 = vpack.c.b16 %v808, %v807
    %v867 = vpack.c.b16 %v810, %v809
    %v868 = vpack.c.b16 %v812, %v811
    %v869 = vpack.c.b16 %v814, %v813
    %v870 = vpack.c.b16 %v816, %v815
    %v871 = vpack.c.b16 %v818, %v817
    %v872 = vpack.c.b16 %v820, %v819
    %v873 = vpack.c.b16 %v822, %v821
    %v874 = vpack.c.b16 %v824, %v823
    %v875 = vpack.c.b16 %v826, %v825
    %v876 = vpack.c.b16 %v828, %v827
    %v877 = vpack.c.b16 %v830, %v829
    %v878 = vpack.c.b16 %v832, %v831
    %v879 = vpack.c.b16 %v834, %v833
    %v880 = vpack.c.b16 %v836, %v835
    %v881 = vpack.c.b16 %v838, %v837
    %v882 = vpack.c.b16 %v840, %v839
    %v883 = vpack.c.b16 %v842, %v841
    %v884 = vpack.c.b16 %v844, %v843
    %v885 = vpack.c.b16 %v846, %v845
    %v886 = vpack.c.b16 %v848, %v847
    %v887 = vpack.c.b16 %v850, %v849
    %v888 = vpack.c.b16 %v852, %v851
    %v889 = vpack.c.b16 %v854, %v853
    %v890 = vpack.c.b16 %v856, %v855
    %v891 = vpack.c.b16 %v858, %v857
    %v892 = vpack.c.b16 %v860, %v859
    %925 = vmatpush.bf16.msra.mxu0 %v868
    %926 = vmatpush.bf16.msra.mxu0 %v867
    %927 = vmatpush.bf16.msra.mxu0 %v866
    %928 = vmatpush.bf16.msra.mxu0 %v865
    %929 = vmatpush.bf16.msra.mxu0 %v864
    %930 = vmatpush.bf16.msra.mxu0 %v863
    %931 = vmatpush.bf16.msra.mxu0 %v862
    %932 = vmatpush.bf16.msra.mxu0 %v861
    %933 = vmatmul.bf16.gmra.mxu0 %v665
    %v934 = vpop.f32.mrf.mxu0
    %v935 = vadd.f32 0.0, %v934
    %v936 = vpop.f32.mrf.mxu0
    %v937 = vadd.f32 0.0, %v936
    %938 = vdwg.mxu0
    %939 = vmatpush.bf16.msra.mxu0 %v876
    %940 = vmatpush.bf16.msra.mxu0 %v875
    %941 = vmatpush.bf16.msra.mxu0 %v874
    %942 = vmatpush.bf16.msra.mxu0 %v873
    %943 = vmatpush.bf16.msra.mxu0 %v872
    %944 = vmatpush.bf16.msra.mxu0 %v871
    %945 = vmatpush.bf16.msra.mxu0 %v870
    %946 = vmatpush.bf16.msra.mxu0 %v869
    %947 = vmatmul.bf16.gmra.mxu0 %v666
    %v948 = vpop.f32.mrf.mxu0
    %v949 = vadd.f32 %v935, %v948
    %v950 = vpop.f32.mrf.mxu0
    %v951 = vadd.f32 %v937, %v950
    %952 = vdwg.mxu0
    %953 = vmatpush.bf16.msra.mxu0 %v884
    %954 = vmatpush.bf16.msra.mxu0 %v883
    %955 = vmatpush.bf16.msra.mxu0 %v882
    %956 = vmatpush.bf16.msra.mxu0 %v881
    %957 = vmatpush.bf16.msra.mxu0 %v880
    %958 = vmatpush.bf16.msra.mxu0 %v879
    %959 = vmatpush.bf16.msra.mxu0 %v878
    %960 = vmatpush.bf16.msra.mxu0 %v877
    %961 = vmatmul.bf16.gmra.mxu0 %v667
    %v962 = vpop.f32.mrf.mxu0
    %v963 = vadd.f32 %v949, %v962
    %v964 = vpop.f32.mrf.mxu0
    %v965 = vadd.f32 %v951, %v964
    %966 = vdwg.mxu0
    %967 = vmatpush.bf16.msra.mxu0 %v892
    %968 = vmatpush.bf16.msra.mxu0 %v891
    %969 = vmatpush.bf16.msra.mxu0 %v890
    %970 = vmatpush.bf16.msra.mxu0 %v889
    %971 = vmatpush.bf16.msra.mxu0 %v888
    %972 = vmatpush.bf16.msra.mxu0 %v887
    %973 = vmatpush.bf16.msra.mxu0 %v886
    %974 = vmatpush.bf16.msra.mxu0 %v885
    %975 = vmatmul.bf16.gmra.mxu0 %v668
    %v976 = vpop.f32.mrf.mxu0
    %v977 = vadd.f32 %v963, %v976
    %v978 = vpop.f32.mrf.mxu0
    %v979 = vadd.f32 %v965, %v978
    %980 = vdwg.mxu0
    %981 = vst [vmem:[#allocation8] sm:$0xff] %v977
    %982 = vst [vmem:[#allocation8 + $0x8] sm:$0xff] %v979
    // Predicated region
    $region26: #{tpu_custom_call.1} parent=1 // pred_check
      _
    $region27: #{tpu_custom_call.1} parent=1 // pred_check_branch
      %984 = sbr.rel (0) target = $region29
    $region28: #{tpu_custom_call.1} parent=1 // pred_region
      %986 = vsyncadd [#allocation4], 0
      %s987 = sshll.u32 [#allocation8], 4
      %s988 = int_to_ptr.vmem [resolvable:$true] %s987
      %s989 = sshll.u32 %s3, 4
      %s990 = int_to_ptr.hbm [resolvable:$true] %s989
      %995 = dma.vmem_to_hbm [thread:$0]  %s988, 256, %s990, [#allocation4], 128, 128, 8
    $region29: #{tpu_custom_call.1} parent=1 // pred_fallthru
      _
    // Predicated region
    $region30: #{tpu_custom_call.1} parent=1 // pred_check
      _
    $region31: #{tpu_custom_call.1} parent=1 // pred_check_branch
      %997 = sbr.rel (0) target = $region33
    $region32: #{tpu_custom_call.1} parent=1 // pred_region
      %999 = dma.done [#allocation4], 256
    $region33: #{tpu_custom_call.1} parent=1 // pred_fallthru
      _
    %1000 = vsyncpa [#allocation3], 1
    %1001 = vsyncpa [#allocation6], 1
    %1002 = vsyncpa [#allocation4], 1

</llo_original>
